<compile_context>
chip_gen: v7x
topology: tpu7x:2x2x1
jax: 0.10.0
libtpu: 0.0.40
codegen_flags: <defaults>
</compile_context>

<pallas_src>
import jax
import jax.numpy as jnp
from jax.experimental import pallas as pl
from jax.experimental.pallas import tpu as pltpu


def _last_hidden_kernel(h_ref, o_ref):
    # h_ref: (bt, H) view of hidden_state[num_layers-1, i*bt:(i+1)*bt, :]
    #        (layer dim squeezed away by the BlockSpec)
    # o_ref: (bt, H)
    o_ref[...] = h_ref[...]


def _pick_batch_tile(batch, hidden, itemsize, vmem_budget_bytes=16 * 1024 * 1024):
    """Largest batch tile such that ~4 resident copies of a (bt, H) tile
    (double-buffered input + output) fit the scoped-VMEM budget.
    16 MiB is conservative enough for v5e; v6e/v7x have more headroom."""
    if batch <= 8 or batch % 8 != 0:
        # A full-dim block always satisfies the (8, 128) tiling rule.
        return batch
    row_bytes = max(hidden * itemsize, 1)
    max_rows = max(vmem_budget_bytes // (4 * row_bytes), 8)
    bt = min(batch, 1024, (max_rows // 8) * 8)
    bt = max(bt, 8)
    # Avoid partial blocks: shrink to a multiple of 8 that divides batch
    # (terminates at 8 since batch % 8 == 0).
    while batch % bt != 0:
        bt -= 8
    return bt


def gru_last_hidden_state(output, hidden_state, *, block_batch=None):
    """Pallas equivalent of GRULastHiddenState.forward((output, hidden_state)).

    Returns hidden_state[-1] with shape (batch, hidden).
    """
    del output  # output[:, -1] is dead in the reference module; never DMA it.
    num_layers, batch, hidden = hidden_state.shape

    if block_batch is None:
        block_batch = _pick_batch_tile(batch, hidden, hidden_state.dtype.itemsize)
    assert batch % block_batch == 0, "block_batch must divide batch"

    last_layer = num_layers - 1
    grid = (batch // block_batch,)

    return pl.pallas_call(
        _last_hidden_kernel,
        out_shape=jax.ShapeDtypeStruct((batch, hidden), hidden_state.dtype),
        grid_spec=pl.GridSpec(
            grid=grid,
            in_specs=[
                # Squeeze the layer dim; tile the batch dim; keep hidden full-width.
                pl.BlockSpec(
                    (pl.Squeezed(), block_batch, hidden),
                    lambda i: (last_layer, i, 0),
                ),
            ],
            out_specs=pl.BlockSpec((block_batch, hidden), lambda i: (i, 0)),
        ),
        compiler_params=pltpu.CompilerParams(
            dimension_semantics=("parallel",),  # lets v7x's 2 TCs split the copy
        ),
    )(hidden_state)


if __name__ == "__main__":
    key = jax.random.PRNGKey(0)
    k_out, k_hid, k_hid2 = jax.random.split(key, 3)

    # --- Small toy shapes matching the module (batch_first GRU outputs). ---
    batch, seq, hidden, num_layers = 2, 8, 32, 2
    output = jax.random.normal(k_out, (batch, seq, hidden), dtype=jnp.float32)
    hidden_state = jax.random.normal(
        k_hid, (num_layers, batch, hidden), dtype=jnp.float32
    )

    result = jax.block_until_ready(gru_last_hidden_state(output, hidden_state))
    assert result.shape == (batch, hidden)
    assert jnp.allclose(result, hidden_state[-1]), "mismatch vs reference (small case)"

    # --- Exercise the batch-tiled path (grid > 1, lane-dense hidden). ---
    b2, h2, l2 = 32, 256, 3
    hs2 = jax.random.normal(k_hid2, (l2, b2, h2), dtype=jnp.float32)
    out2 = jnp.zeros((b2, 4, h2), dtype=jnp.float32)  # placeholder GRU output (unused)
    res2 = jax.block_until_ready(gru_last_hidden_state(out2, hs2, block_batch=8))
    assert res2.shape == (b2, h2)
    assert jnp.allclose(res2, hs2[-1]), "mismatch vs reference (tiled case)"

    print("KERNEL_OK")
</pallas_src>

<mosaic_0001>
module attributes {stable_mosaic.version = 11 : i64} {
  func.func @_last_hidden_kernel(%arg0: i32, %arg1: memref<1x2x32xf32, #tpu.memory_space<vmem>>, %arg2: memref<2x32xf32, #tpu.memory_space<vmem>>) attributes {dimension_semantics = [#tpu.dimension_semantics<parallel>], iteration_bounds = array<i64: 1>, scalar_prefetch = 0 : i64, scratch_operands = 0 : i64, tpu.core_type = #tpu.core_type<tc>, window_params = [{transform_indices = @transform_0, window_bounds = array<i64: 1, 2, 32>}, {transform_indices = @transform_1, window_bounds = array<i64: 2, 32>}]} {
    %c0 = arith.constant 0 : index
    %c0_0 = arith.constant 0 : index
    %c0_1 = arith.constant 0 : index
    %0 = vector.load %arg1[%c0, %c0_0, %c0_1] : memref<1x2x32xf32, #tpu.memory_space<vmem>>, vector<1x2x32xf32>
    %1 = vector.shape_cast %0 : vector<1x2x32xf32> to vector<2x32xf32>
    %c0_2 = arith.constant 0 : index
    %c0_3 = arith.constant 0 : index
    %2 = vector.load %arg2[%c0_2, %c0_3] : memref<2x32xf32, #tpu.memory_space<vmem>>, vector<2x32xf32>
    tpu.vector_store %arg2[%c0_2, %c0_3], %1 {strides = array<i32>} : memref<2x32xf32, #tpu.memory_space<vmem>>, vector<2x32xf32>,
    return
  }
  func.func @transform_0(%arg0: i32) -> (i32, i32, i32) {
    %c1_i32 = arith.constant 1 : i32
    %c0_i32 = arith.constant 0 : i32
    %c0_i32_0 = arith.constant 0 : i32
    return %c1_i32, %arg0, %c0_i32 : i32, i32, i32
  }
  func.func @transform_1(%arg0: i32) -> (i32, i32) {
    %c0_i32 = arith.constant 0 : i32
    %c0_i32_0 = arith.constant 0 : i32
    return %arg0, %c0_i32 : i32, i32
  }
}

</mosaic_0001>

<llo_original>
// kernel: tpu_custom_call.1
$region0: #{tpu_custom_call.1}
  #allocation0 [shape = 'u32[]', space=smem, size = 0x4, offset = 0x4, fixed_abs, tag = 'smem constant byte address 0x4 - core index']
  #allocation1 [shape = 'u32[144,128]{1,0:T(1,128)}', space=vmem, size = 0x12000, scoped, tag = 'internal scratch']
  %s0 = inlined_call_operand.hbm [shape: f32[2,2,32], index: 0, kind: input, shape index: {}]
  %s1 = inlined_call_operand.hbm [shape: f32[2,32], index: 1, kind: output, shape index: {}]
  %s2 = sld [smem:[#allocation0]]
  $region18: #{tpu_custom_call.1} parent=0
    _
  %s4 = ssub.s32 1, %s2
  %s5 = scalar_select 0, %s4, %s2
  $region1: #{tpu_custom_call.1} parent=0
    #allocation2 [shape = 'u8[1024]{0}', space=vmem, size = 0x400, scoped, tag = 'input window, operand 0, single buffered']
    #allocation3 [shape = 's32[1]{0}', space=sflag, size = 0x4, scoped, tag = 'scoped memory for tpu_custom_call.1']
    #allocation4 [shape = 's32[1]{0}', space=sflag, size = 0x4, scoped, tag = 'scoped memory for tpu_custom_call.1']
    #allocation5 [shape = 'u8[1024]{0}', space=vmem, size = 0x400, scoped, tag = 'output window, operand 0, single buffered']
    %6 = vsyncpa [#allocation3], 0
    %7 = vsyncpa [#allocation4], 0
    // Predicated region
    $region2: #{tpu_custom_call.1} parent=1 // pred_check
      _
    $region3: #{tpu_custom_call.1} parent=1 // pred_check_branch
      %9 = sbr.rel (0) target = $region5
    $region4: #{tpu_custom_call.1} parent=1 // pred_region
      %s11 = ssub.s32 32, 32
      %12 = vsyncadd [#allocation3], %s11
      %s13 = scalar_lea.hbm %s0, 32
      %s15 = sshll.u32 [#allocation2], 4
      %s16 = int_to_ptr.vmem [resolvable:$true] %s15
      %18 = dma.hbm_to_vmem [thread:$0]  %s13, 32, %s16, [#allocation3]
    $region5: #{tpu_custom_call.1} parent=1 // pred_fallthru
      _
    // Predicated region
    $region6: #{tpu_custom_call.1} parent=1 // pred_check
      _
    $region7: #{tpu_custom_call.1} parent=1 // pred_check_branch
      %20 = sbr.rel (0) target = $region9
    $region8: #{tpu_custom_call.1} parent=1 // pred_region
      %21 = dma.done [#allocation3], 32
    $region9: #{tpu_custom_call.1} parent=1 // pred_fallthru
      _
    %v22 = vld [vmem:[#allocation2] sm:$0x3]
    %vm23 = vcmask 254976
    %24 = vst.msk [vmem:[#allocation5] sm:$0x3] %vm23, %v22
    // Predicated region
    $region10: #{tpu_custom_call.1} parent=1 // pred_check
      _
    $region11: #{tpu_custom_call.1} parent=1 // pred_check_branch
      %26 = sbr.rel (0) target = $region13
    $region12: #{tpu_custom_call.1} parent=1 // pred_region
      %s28 = ssub.s32 32, 32
      %29 = vsyncadd [#allocation4], %s28
      %s31 = sshll.u32 [#allocation5], 4
      %s32 = int_to_ptr.vmem [resolvable:$true] %s31
      %34 = dma.vmem_to_hbm [thread:$0]  %s32, 32, %s1, [#allocation4]
    $region13: #{tpu_custom_call.1} parent=1 // pred_fallthru
      _
    // Predicated region
    $region14: #{tpu_custom_call.1} parent=1 // pred_check
      _
    $region15: #{tpu_custom_call.1} parent=1 // pred_check_branch
      %36 = sbr.rel (0) target = $region17
    $region16: #{tpu_custom_call.1} parent=1 // pred_region
      %37 = dma.done [#allocation4], 32
    $region17: #{tpu_custom_call.1} parent=1 // pred_fallthru
      _
    %38 = vsyncpa [#allocation3], 1
    %39 = vsyncpa [#allocation4], 1

</llo_original>
